<compile_context>
chip_gen: v7x
topology: tpu7x:2x2x1
jax: 0.10.0
libtpu: 0.0.40
codegen_flags: <defaults>
</compile_context>

<pallas_src>
import functools

import jax
import jax.numpy as jnp
from jax import lax
from jax.experimental import pallas as pl
from jax.experimental.pallas import tpu as pltpu

EPS_SIGMA = 1e-06


# --------------------------------------------------------------------------- #
# Kernel
# --------------------------------------------------------------------------- #
def _fr_dirichlet_kernel(x_ref, xres_ref, prm_ref, w_ref, o_ref, *,
                         width, flip_roll):
    """One (Bblk, Cblk, HWpad) tile: Dirichlet energy + FRN normalize + mish."""
    x = x_ref[...].astype(jnp.float32)            # (Bb, Cb, HWp), lane-dense
    xr = xres_ref[...].astype(jnp.float32)
    hw = x.shape[-1]
    ax = x.ndim - 1

    def rolled(jnp_shift):
        # pltpu.roll with jnp.roll semantics: out[k] = x[(k - shift) % hw].
        s = (hw - jnp_shift) % hw if flip_roll else jnp_shift
        return pltpu.roll(x, shift=s, axis=ax)

    # Neighbours via full-width XLU rolls; invalid / padded pairs carry weight 0.
    x_th = rolled(hw - width)      # x[k + W]      : next theta row, same phi
    x_ph = rolled(hw - 1)          # x[k + 1]      : next phi column, same row
    x_wr = rolled(width - 1)       # x[k - (W-1)]  : periodic phi wrap pair

    d_th = x_th - x
    d_ph = x_ph - x
    d_wr = x_wr - x

    w = w_ref[...]                 # (3, 1, HWp) zero-padded quadrature weights
    e = d_th * d_th * w[0] + d_ph * d_ph * w[1] + d_wr * d_wr * w[2]
    energy = jnp.sum(e, axis=-1, keepdims=True)   # single reduce -> (Bb, Cb, 1)

    # Per-channel params packed as [scale, |eps|+EPSSigma, bias-th, th].
    prm = prm_ref[...]                            # (4, Cb, 1)
    scale = prm[0][None]
    epsp = prm[1][None]
    bias_minus_th = prm[2][None]
    th = prm[3][None]

    # dxNorm = sqrt(dirichlet + realSgn(eps) + EPSSigma); fold scale / dxNorm
    # into one per-(batch, channel) factor with a single EUP rsqrt.
    s = scale * lax.rsqrt(energy + epsp)          # (Bb, Cb, 1)

    # z = xN + xRes - th  with  xN = x*s + bias   ((bias - th) is prefolded).
    z = x * s + bias_minus_th + xr

    # Branch-free mish:  tanh(softplus(z)) = p / (p + 2)  with  p = e^z(e^z + 2).
    # e^z is clamped at exp(30) (ratio is already 1.0 to f32 precision) so no
    # overflow branch is needed; for z << 0, p ~ 2 e^z with no cancellation.
    ez = jnp.exp(jnp.minimum(z, 30.0))
    p = ez * (ez + 2.0)
    mish = z * p * pl.reciprocal(p + 2.0, approx=True)

    o_ref[...] = (mish + th).astype(o_ref.dtype)


# --------------------------------------------------------------------------- #
# Quadrature weights for the finite-difference Dirichlet energy
# --------------------------------------------------------------------------- #
def _dh_weights(B, hw_pad):
    """(3, 1, hw_pad) zero-padded weights for the rolled differences."""
    H = W = 2 * B
    HW = H * W
    j = jnp.arange(H, dtype=jnp.float32)
    theta = jnp.pi * (2.0 * j + 1.0) / (4.0 * B)          # DH colatitudes
    d_theta = jnp.pi / (2.0 * B)
    d_phi = jnp.pi / B
    theta_mid = theta[:-1] + 0.5 * d_theta
    # (df/dth)^2 sin(th) dth dph  ->  (Delta_th f)^2 * sin(th_mid) * dph / dth
    wth_row = jnp.sin(theta_mid) * d_phi / d_theta        # (H-1,)
    # (1/sin^2)(df/dph)^2 sin(th) dth dph -> (Delta_ph f)^2 * dth / (dph * sin)
    wph_row = d_theta / (d_phi * jnp.sin(theta))          # (H,)

    # theta pairs (j, j+1): weight wth_row[j] on rows 0..H-2; the last row (a
    # pole-to-pole wrap under the roll) gets zero weight.
    w_th = jnp.concatenate([jnp.repeat(wth_row, W), jnp.zeros((W,), jnp.float32)])
    # in-row phi pairs (i, i+1), i < W-1: wph_row[j]; column W-1 (a cross-row
    # neighbour under the flat roll) gets zero weight.
    w_ph = jnp.concatenate(
        [jnp.broadcast_to(wph_row[:, None], (H, W - 1)),
         jnp.zeros((H, 1), jnp.float32)], axis=1).reshape(-1)
    # periodic wrap pair (column W-1 <-> column 0 of the same row).
    w_wr = jnp.concatenate(
        [jnp.zeros((H, W - 1), jnp.float32), wph_row[:, None]], axis=1).reshape(-1)

    w = jnp.stack([w_th, w_ph, w_wr], axis=0)             # (3, HW)
    if hw_pad > HW:
        w = jnp.pad(w, ((0, 0), (0, hw_pad - HW)))
    return w.reshape(3, 1, hw_pad)


# --------------------------------------------------------------------------- #
# Hardware / tiling helpers
# --------------------------------------------------------------------------- #
@functools.lru_cache(maxsize=1)
def _roll_is_jnp_convention():
    """Verify pltpu.roll's lane-shift direction against jnp.roll (runs once)."""
    try:
        def k(x_ref, o_ref):
            o_ref[...] = pltpu.roll(x_ref[...], shift=3, axis=1)
        x = jnp.arange(8 * 128, dtype=jnp.float32).reshape(8, 128)
        got = pl.pallas_call(k, out_shape=jax.ShapeDtypeStruct((8, 128),
                                                               jnp.float32))(x)
        return bool(jnp.array_equal(got, jnp.roll(x, 3, axis=1)))
    except Exception:
        return True   # documented convention


@functools.lru_cache(maxsize=1)
def _num_tensorcores():
    """TensorCores sharing 'parallel' grid axes (v5e/v6e: 1, v7x: 2)."""
    try:
        info = pltpu.get_tpu_info()
        for attr in ("num_cores", "num_tensorcores", "tensorcores_per_chip",
                     "cores_per_chip"):
            n = getattr(info, attr, None)
            if isinstance(n, int) and 1 <= n <= 8:
                return n
    except Exception:
        pass
    try:
        if "v7" in jax.devices()[0].device_kind.lower():
            return 2
    except Exception:
        pass
    return 1


def _legal_divisors(total, quantum):
    return [d for d in range(1, total + 1)
            if total % d == 0 and (d == total or d % quantum == 0)]


def _choose_tiles(batch, channels, hw, itemsize, budget_bytes, num_cores):
    """Pick (Bblk, Cblk): per-step demand (dbl-buffered I/O + f32 temps) fits the
    budget; on multi-TC chips (v7x) split until the grid is even and >= 2/core."""
    bytes_per_row = hw * (6 * itemsize + 6 * 4)   # 3 io tensors x 2 bufs + ~6 f32 temps
    max_rows = max(1, budget_bytes // bytes_per_row)
    quantum = 8 * max(1, 4 // itemsize)           # 8 (f32) / 16 (bf16) / 32 (int8)

    c_opts = _legal_divisors(channels, quantum)
    c_fit = [d for d in c_opts if d <= max_rows]
    # Safeguard: if no channel block fits, take the smallest legal one and let
    # bblk drop to 1 instead of silently blowing the budget.
    cblk = max(c_fit) if c_fit else min(c_opts)
    b_opts = _legal_divisors(batch, 1)
    b_fit = [d for d in b_opts if d * cblk <= max_rows]
    bblk = max(b_fit) if b_fit else 1

    if num_cores > 1:
        # Megacore (v7x): even grid total, >= 2 slices per core when possible,
        # splitting batch first, then channels.  Single-TC chips skip this.
        def n_steps(bb, cb):
            return (batch // bb) * (channels // cb)
        while (n_steps(bblk, cblk) < 2 * num_cores
               or n_steps(bblk, cblk) % num_cores != 0):
            b_smaller = [d for d in b_opts if d < bblk]
            c_smaller = [d for d in c_opts if d < cblk]
            if b_smaller:
                bblk = max(b_smaller)
            elif c_smaller:
                cblk = max(c_smaller)
            else:
                break
    return bblk, cblk


# --------------------------------------------------------------------------- #
# Forward wrapper
# --------------------------------------------------------------------------- #
def fr_dirichlet_forward(x, x_res, scale, bias, eps, th, B, *,
                         vmem_tile_budget_bytes=8 * 1024 * 1024):
    b, C, H, W = x.shape
    assert H == 2 * B and W == 2 * B, "expected a 2B x 2B Driscoll-Healy grid"
    HW = H * W
    hw_pad = -(-HW // 128) * 128          # lane-dense even when 4B^2 % 128 != 0
    if x_res is None:
        x_res = jnp.zeros_like(x)

    # Free reshape: NCHW is contiguous in (H, W) -> (b, C, H*W) lane-dense view.
    xf = x.reshape(b, C, HW)
    xrf = x_res.reshape(b, C, HW)
    if hw_pad != HW:
        pad = ((0, 0), (0, 0), (0, hw_pad - HW))
        xf = jnp.pad(xf, pad)
        xrf = jnp.pad(xrf, pad)

    w = _dh_weights(B, hw_pad)
    # Packed per-channel params [scale, |eps|+EPSSigma, bias-th, th] -> (4, C, 1).
    prm = jnp.stack(
        [scale.reshape(C),
         jnp.abs(eps).reshape(C) + EPS_SIGMA,     # realSgn(eps) = |eps| (assumed)
         (bias - th).reshape(C),
         th.reshape(C)], axis=0).astype(jnp.float32).reshape(4, C, 1)

    itemsize = jnp.dtype(x.dtype).itemsize
    bblk, cblk = _choose_tiles(b, C, hw_pad, itemsize,
                               vmem_tile_budget_bytes, _num_tensorcores())
    grid = (b // bblk, C // cblk)

    tile_elems = bblk * cblk * hw_pad
    demand = (tile_elems * (6 * itemsize + 6 * 4)     # dbl-buffered I/O + f32 temps
              + 2 * (3 * hw_pad + 4 * C) * 4)         # weights + packed params
    vmem_limit = int(max(16 << 20, min(48 << 20, demand + (8 << 20))))

    data_spec = pl.BlockSpec((bblk, cblk, hw_pad), lambda i, j: (i, j, 0))
    out_flat = pl.pallas_call(
        functools.partial(_fr_dirichlet_kernel, width=W,
                          flip_roll=not _roll_is_jnp_convention()),
        out_shape=jax.ShapeDtypeStruct((b, C, hw_pad), x.dtype),
        grid_spec=pltpu.PrefetchScalarGridSpec(
            num_scalar_prefetch=0,
            grid=grid,
            in_specs=[
                data_spec,                                            # x
                data_spec,                                            # xRes
                pl.BlockSpec((4, cblk, 1), lambda i, j: (0, j, 0)),   # packed params
                pl.BlockSpec((3, 1, hw_pad), lambda i, j: (0, 0, 0)), # packed weights
            ],
            out_specs=data_spec),
        compiler_params=pltpu.CompilerParams(
            dimension_semantics=("parallel", "parallel"),
            vmem_limit_bytes=vmem_limit),
    )(xf, xrf, prm, w)

    if hw_pad != HW:
        out_flat = out_flat[..., :HW]
    return out_flat.reshape(b, C, H, W)


# --------------------------------------------------------------------------- #
# Pure-JAX reference (same finite-difference rsDirichlet model, exact mish)
# --------------------------------------------------------------------------- #
def _reference_forward(x, x_res, scale, bias, eps, th, B):
    b, C, H, W = x.shape
    HW = H * W
    xf = x.reshape(b, C, HW).astype(jnp.float32)
    w = _dh_weights(B, HW).reshape(3, HW)
    x_th = jnp.roll(xf, HW - W, axis=-1)
    x_ph = jnp.roll(xf, HW - 1, axis=-1)
    x_wr = jnp.roll(xf, W - 1, axis=-1)
    e = ((x_th - xf) ** 2 * w[0] + (x_ph - xf) ** 2 * w[1]
         + (x_wr - xf) ** 2 * w[2])
    dirichlet = e.sum(-1)                                              # (b, C)
    dx_norm = jnp.sqrt(dirichlet + (jnp.abs(eps) + EPS_SIGMA).reshape(1, C))
    xn = (x.astype(jnp.float32) / dx_norm[..., None, None]
          * scale.reshape(1, C, 1, 1) + bias.reshape(1, C, 1, 1))
    xres = 0.0 if x_res is None else x_res.astype(jnp.float32)
    z = xn + xres - th.reshape(1, C, 1, 1)
    mish = z * jnp.tanh(jax.nn.softplus(z))
    return mish + th.reshape(1, C, 1, 1)


if __name__ == "__main__":
    B = 8                 # SH bandlimit -> 2B x 2B = 16 x 16 Driscoll-Healy grid
    channels = 4
    batch = 2
    H = W = 2 * B

    key = jax.random.PRNGKey(0)
    kx, kres, kth = jax.random.split(key, 3)

    x = jax.random.normal(kx, (batch, channels, H, W), dtype=jnp.float32)
    x_res = jax.random.normal(kres, (batch, channels, H, W), dtype=jnp.float32)

    # Deterministic parameter init mirroring the module's __init__:
    scale = jnp.ones((1, channels), jnp.float32)                 # ones_
    bias = jnp.zeros((1, channels), jnp.float32)                 # zeros_
    eps = jnp.full((1, channels), EPS_SIGMA, jnp.float32)        # constant_(EPSSigma)
    xavier_bound = (6.0 / (1.0 + channels)) ** 0.5               # xavier_uniform_
    th = jax.random.uniform(kth, (1, channels), jnp.float32,
                            minval=-xavier_bound, maxval=xavier_bound)

    out = fr_dirichlet_forward(x, x_res, scale, bias, eps, th, B)
    jax.block_until_ready(out)

    assert out.shape == (batch, channels, H, W)
    assert bool(jnp.all(jnp.isfinite(out)))
    ref = _reference_forward(x, x_res, scale, bias, eps, th, B)
    max_err = float(jnp.max(jnp.abs(out.astype(jnp.float32) - ref)))
    # Loose bound: the only approximate step is the EUP reciprocal in mish.
    assert max_err < 5e-2, f"kernel vs pure-JAX reference max abs err {max_err}"
    print("KERNEL_OK")
</pallas_src>

<mosaic_0001>
module attributes {stable_mosaic.version = 11 : i64} {
  func.func @k(%arg0: memref<8x128xf32, #tpu.memory_space<vmem>>, %arg1: memref<8x128xf32, #tpu.memory_space<vmem>>) attributes {dimension_semantics = [], scalar_prefetch = 0 : i64, scratch_operands = 0 : i64, tpu.core_type = #tpu.core_type<tc>} {
    %c0 = arith.constant 0 : index
    %c0_0 = arith.constant 0 : index
    %0 = vector.load %arg0[%c0, %c0_0] : memref<8x128xf32, #tpu.memory_space<vmem>>, vector<8x128xf32>
    %c3_i32 = arith.constant 3 : i32
    %1 = tpu.dynamic_rotate %0 by %c3_i32 dim 1 : vector<8x128xf32>, i32 -> vector<8x128xf32>
    %c0_1 = arith.constant 0 : index
    %c0_2 = arith.constant 0 : index
    %2 = vector.load %arg1[%c0_1, %c0_2] : memref<8x128xf32, #tpu.memory_space<vmem>>, vector<8x128xf32>
    tpu.vector_store %arg1[%c0_1, %c0_2], %1 {strides = array<i32>} : memref<8x128xf32, #tpu.memory_space<vmem>>, vector<8x128xf32>,
    return
  }
}

module attributes {stable_mosaic.version = 11 : i64} {
  func.func @_fr_dirichlet_kernel(%arg0: i32, %arg1: i32, %arg2: memref<2x4x256xf32, #tpu.memory_space<vmem>>, %arg3: memref<2x4x256xf32, #tpu.memory_space<vmem>>, %arg4: memref<4x4x1xf32, #tpu.memory_space<vmem>>, %arg5: memref<3x1x256xf32, #tpu.memory_space<vmem>>, %arg6: memref<2x4x256xf32, #tpu.memory_space<vmem>>) attributes {dimension_semantics = [#tpu.dimension_semantics<parallel>, #tpu.dimension_semantics<parallel>], iteration_bounds = array<i64: 1, 1>, scalar_prefetch = 0 : i64, scratch_operands = 0 : i64, tpu.core_type = #tpu.core_type<tc>, window_params = [{transform_indices = @transform_0, window_bounds = array<i64: 2, 4, 256>}, {transform_indices = @transform_1, window_bounds = array<i64: 2, 4, 256>}, {transform_indices = @transform_2, window_bounds = array<i64: 4, 4, 1>}, {pipeline_mode = #tpu.pipeline_mode<synchronous>, transform_indices = @transform_3, window_bounds = array<i64: 3, 1, 256>}, {transform_indices = @transform_4, window_bounds = array<i64: 2, 4, 256>}]} {
    %c0 = arith.constant 0 : index
    %c0_0 = arith.constant 0 : index
    %c0_1 = arith.constant 0 : index
    %0 = vector.load %arg2[%c0, %c0_0, %c0_1] : memref<2x4x256xf32, #tpu.memory_space<vmem>>, vector<2x4x256xf32>
    %c0_2 = arith.constant 0 : index
    %c0_3 = arith.constant 0 : index
    %c0_4 = arith.constant 0 : index
    %1 = vector.load %arg3[%c0_2, %c0_3, %c0_4] : memref<2x4x256xf32, #tpu.memory_space<vmem>>, vector<2x4x256xf32>
    %c240_i32 = arith.constant 240 : i32
    %2 = tpu.dynamic_rotate %0 by %c240_i32 dim 2 : vector<2x4x256xf32>, i32 -> vector<2x4x256xf32>
    %c255_i32 = arith.constant 255 : i32
    %3 = tpu.dynamic_rotate %0 by %c255_i32 dim 2 : vector<2x4x256xf32>, i32 -> vector<2x4x256xf32>
    %c15_i32 = arith.constant 15 : i32
    %4 = tpu.dynamic_rotate %0 by %c15_i32 dim 2 : vector<2x4x256xf32>, i32 -> vector<2x4x256xf32>
    %5 = arith.subf %2, %0 : vector<2x4x256xf32>
    %6 = arith.subf %3, %0 : vector<2x4x256xf32>
    %7 = arith.subf %4, %0 : vector<2x4x256xf32>
    %c0_5 = arith.constant 0 : index
    %c0_6 = arith.constant 0 : index
    %c0_7 = arith.constant 0 : index
    %8 = vector.load %arg5[%c0_5, %c0_6, %c0_7] : memref<3x1x256xf32, #tpu.memory_space<vmem>>, vector<3x1x256xf32>
    %9 = arith.mulf %5, %5 : vector<2x4x256xf32>
    %10 = vector.extract_strided_slice %8 {offsets = [0, 0, 0], sizes = [1, 1, 256], strides = [1, 1, 1]} : vector<3x1x256xf32> to vector<1x1x256xf32>
    %11 = vector.shape_cast %10 : vector<1x1x256xf32> to vector<1x256xf32>
    %12 = vector.shape_cast %11 : vector<1x256xf32> to vector<1x1x256xf32>
    %13 = vector.broadcast %12 : vector<1x1x256xf32> to vector<2x4x256xf32>
    %14 = arith.mulf %9, %13 : vector<2x4x256xf32>
    %15 = arith.mulf %6, %6 : vector<2x4x256xf32>
    %16 = vector.extract_strided_slice %8 {offsets = [1, 0, 0], sizes = [1, 1, 256], strides = [1, 1, 1]} : vector<3x1x256xf32> to vector<1x1x256xf32>
    %17 = vector.shape_cast %16 : vector<1x1x256xf32> to vector<1x256xf32>
    %18 = vector.shape_cast %17 : vector<1x256xf32> to vector<1x1x256xf32>
    %19 = vector.broadcast %18 : vector<1x1x256xf32> to vector<2x4x256xf32>
    %20 = arith.mulf %15, %19 : vector<2x4x256xf32>
    %21 = arith.addf %14, %20 : vector<2x4x256xf32>
    %22 = arith.mulf %7, %7 : vector<2x4x256xf32>
    %23 = vector.extract_strided_slice %8 {offsets = [2, 0, 0], sizes = [1, 1, 256], strides = [1, 1, 1]} : vector<3x1x256xf32> to vector<1x1x256xf32>
    %24 = vector.shape_cast %23 : vector<1x1x256xf32> to vector<1x256xf32>
    %25 = vector.shape_cast %24 : vector<1x256xf32> to vector<1x1x256xf32>
    %26 = vector.broadcast %25 : vector<1x1x256xf32> to vector<2x4x256xf32>
    %27 = arith.mulf %22, %26 : vector<2x4x256xf32>
    %28 = arith.addf %21, %27 : vector<2x4x256xf32>
    %cst = arith.constant dense<0.000000e+00> : vector<2x4xf32>
    %29 = vector.multi_reduction <add>, %28, %cst [2] : vector<2x4x256xf32> to vector<2x4xf32>
    %30 = vector.shape_cast %29 : vector<2x4xf32> to vector<2x4x1xf32>
    %c0_8 = arith.constant 0 : index
    %c0_9 = arith.constant 0 : index
    %c0_10 = arith.constant 0 : index
    %31 = vector.load %arg4[%c0_8, %c0_9, %c0_10] : memref<4x4x1xf32, #tpu.memory_space<vmem>>, vector<4x4x1xf32>
    %32 = vector.extract_strided_slice %31 {offsets = [0, 0, 0], sizes = [1, 4, 1], strides = [1, 1, 1]} : vector<4x4x1xf32> to vector<1x4x1xf32>
    %33 = vector.shape_cast %32 : vector<1x4x1xf32> to vector<4x1xf32>
    %34 = vector.shape_cast %33 : vector<4x1xf32> to vector<1x4x1xf32>
    %35 = vector.extract_strided_slice %31 {offsets = [1, 0, 0], sizes = [1, 4, 1], strides = [1, 1, 1]} : vector<4x4x1xf32> to vector<1x4x1xf32>
    %36 = vector.shape_cast %35 : vector<1x4x1xf32> to vector<4x1xf32>
    %37 = vector.shape_cast %36 : vector<4x1xf32> to vector<1x4x1xf32>
    %38 = vector.extract_strided_slice %31 {offsets = [2, 0, 0], sizes = [1, 4, 1], strides = [1, 1, 1]} : vector<4x4x1xf32> to vector<1x4x1xf32>
    %39 = vector.shape_cast %38 : vector<1x4x1xf32> to vector<4x1xf32>
    %40 = vector.shape_cast %39 : vector<4x1xf32> to vector<1x4x1xf32>
    %41 = vector.extract_strided_slice %31 {offsets = [3, 0, 0], sizes = [1, 4, 1], strides = [1, 1, 1]} : vector<4x4x1xf32> to vector<1x4x1xf32>
    %42 = vector.shape_cast %41 : vector<1x4x1xf32> to vector<4x1xf32>
    %43 = vector.shape_cast %42 : vector<4x1xf32> to vector<1x4x1xf32>
    %44 = vector.broadcast %37 : vector<1x4x1xf32> to vector<2x4x1xf32>
    %45 = arith.addf %30, %44 : vector<2x4x1xf32>
    %46 = math.rsqrt %45 : vector<2x4x1xf32>
    %47 = vector.broadcast %34 : vector<1x4x1xf32> to vector<2x4x1xf32>
    %48 = arith.mulf %47, %46 : vector<2x4x1xf32>
    %49 = vector.broadcast %48 : vector<2x4x1xf32> to vector<2x4x256xf32>
    %50 = arith.mulf %0, %49 : vector<2x4x256xf32>
    %51 = vector.broadcast %40 : vector<1x4x1xf32> to vector<2x4x256xf32>
    %52 = arith.addf %50, %51 : vector<2x4x256xf32>
    %53 = arith.addf %52, %1 : vector<2x4x256xf32>
    %cst_11 = arith.constant 3.000000e+01 : f32
    %54 = vector.broadcast %cst_11 : f32 to vector<2x4x256xf32>
    %55 = arith.minimumf %53, %54 : vector<2x4x256xf32>
    %56 = math.exp %55 : vector<2x4x256xf32>
    %cst_12 = arith.constant 2.000000e+00 : f32
    %57 = vector.broadcast %cst_12 : f32 to vector<2x4x256xf32>
    %58 = arith.addf %56, %57 : vector<2x4x256xf32>
    %59 = arith.mulf %56, %58 : vector<2x4x256xf32>
    %60 = arith.mulf %53, %59 : vector<2x4x256xf32>
    %cst_13 = arith.constant 2.000000e+00 : f32
    %61 = vector.broadcast %cst_13 : f32 to vector<2x4x256xf32>
    %62 = arith.addf %59, %61 : vector<2x4x256xf32>
    %63 = tpu.reciprocal %62 {approx = true} : vector<2x4x256xf32> -> vector<2x4x256xf32>
    %64 = arith.mulf %60, %63 : vector<2x4x256xf32>
    %65 = vector.broadcast %43 : vector<1x4x1xf32> to vector<2x4x256xf32>
    %66 = arith.addf %64, %65 : vector<2x4x256xf32>
    %c0_14 = arith.constant 0 : index
    %c0_15 = arith.constant 0 : index
    %c0_16 = arith.constant 0 : index
    %67 = vector.load %arg6[%c0_14, %c0_15, %c0_16] : memref<2x4x256xf32, #tpu.memory_space<vmem>>, vector<2x4x256xf32>
    tpu.vector_store %arg6[%c0_14, %c0_15, %c0_16], %66 {strides = array<i32>} : memref<2x4x256xf32, #tpu.memory_space<vmem>>, vector<2x4x256xf32>,
    return
  }
  func.func @transform_0(%arg0: i32, %arg1: i32) -> (i32, i32, i32) {
    %c0_i32 = arith.constant 0 : i32
    %c0_i32_0 = arith.constant 0 : i32
    return %arg0, %arg1, %c0_i32 : i32, i32, i32
  }
  func.func @transform_1(%arg0: i32, %arg1: i32) -> (i32, i32, i32) {
    %c0_i32 = arith.constant 0 : i32
    %c0_i32_0 = arith.constant 0 : i32
    return %arg0, %arg1, %c0_i32 : i32, i32, i32
  }
  func.func @transform_2(%arg0: i32, %arg1: i32) -> (i32, i32, i32) {
    %c0_i32 = arith.constant 0 : i32
    %c0_i32_0 = arith.constant 0 : i32
    %c0_i32_1 = arith.constant 0 : i32
    return %c0_i32, %arg1, %c0_i32_0 : i32, i32, i32
  }
  func.func @transform_3(%arg0: i32, %arg1: i32) -> (i32, i32, i32) {
    %c0_i32 = arith.constant 0 : i32
    %c0_i32_0 = arith.constant 0 : i32
    %c0_i32_1 = arith.constant 0 : i32
    %c0_i32_2 = arith.constant 0 : i32
    return %c0_i32, %c0_i32_0, %c0_i32_1 : i32, i32, i32
  }
  func.func @transform_4(%arg0: i32, %arg1: i32) -> (i32, i32, i32) {
    %c0_i32 = arith.constant 0 : i32
    %c0_i32_0 = arith.constant 0 : i32
    return %arg0, %arg1, %c0_i32 : i32, i32, i32
  }
}

</mosaic_0001>

<llo_original>
// kernel: tpu_custom_call.1
$region0: #{tpu_custom_call.1}
  #allocation0 [shape = 'u32[]', space=smem, size = 0x4, offset = 0x4, fixed_abs, tag = 'smem constant byte address 0x4 - core index']
  #allocation1 [shape = 'u32[144,128]{1,0:T(1,128)}', space=vmem, size = 0x12000, scoped, tag = 'internal scratch']
  %s0 = inlined_call_operand.hbm [shape: f32[8,128], index: 0, kind: input, shape index: {}]
  %s1 = inlined_call_operand.hbm [shape: f32[8,128], index: 1, kind: output, shape index: {}]
  %s2 = sld [smem:[#allocation0]]
  $region18: #{tpu_custom_call.1} parent=0
    _
  %s4 = ssub.s32 1, %s2
  %s5 = scalar_select 0, %s4, %s2
  $region1: #{tpu_custom_call.1} parent=0
    #allocation2 [shape = 'u8[4096]{0}', space=vmem, size = 0x1000, scoped, tag = 'input window, operand 0, single buffered']
    #allocation3 [shape = 's32[1]{0}', space=sflag, size = 0x4, scoped, tag = 'scoped memory for tpu_custom_call.1']
    #allocation4 [shape = 's32[1]{0}', space=sflag, size = 0x4, scoped, tag = 'scoped memory for tpu_custom_call.1']
    #allocation5 [shape = 'u8[4096]{0}', space=vmem, size = 0x1000, scoped, tag = 'output window, operand 0, single buffered']
    %6 = vsyncpa [#allocation3], 0
    %7 = vsyncpa [#allocation4], 0
    // Predicated region
    $region2: #{tpu_custom_call.1} parent=1 // pred_check
      _
    $region3: #{tpu_custom_call.1} parent=1 // pred_check_branch
      %9 = sbr.rel (0) target = $region5
    $region4: #{tpu_custom_call.1} parent=1 // pred_region
      %s11 = ssub.s32 128, 128
      %12 = vsyncadd [#allocation3], %s11
      %s14 = sshll.u32 [#allocation2], 4
      %s15 = int_to_ptr.vmem [resolvable:$true] %s14
      %17 = dma.hbm_to_vmem [thread:$0]  %s0, 128, %s15, [#allocation3]
    $region5: #{tpu_custom_call.1} parent=1 // pred_fallthru
      _
    // Predicated region
    $region6: #{tpu_custom_call.1} parent=1 // pred_check
      _
    $region7: #{tpu_custom_call.1} parent=1 // pred_check_branch
      %19 = sbr.rel (0) target = $region9
    $region8: #{tpu_custom_call.1} parent=1 // pred_region
      %20 = dma.done [#allocation3], 128
    $region9: #{tpu_custom_call.1} parent=1 // pred_fallthru
      _
    %v21 = vld [vmem:[#allocation2] sm:$0xff]
    %22 = vrot.lane.b32.xlu0 %v21, 3
    %v23 = vpop.permute.xlu0 %22
    %24 = vst [vmem:[#allocation5] sm:$0xff] %v23
    // Predicated region
    $region10: #{tpu_custom_call.1} parent=1 // pred_check
      _
    $region11: #{tpu_custom_call.1} parent=1 // pred_check_branch
      %26 = sbr.rel (0) target = $region13
    $region12: #{tpu_custom_call.1} parent=1 // pred_region
      %s28 = ssub.s32 128, 128
      %29 = vsyncadd [#allocation4], %s28
      %s31 = sshll.u32 [#allocation5], 4
      %s32 = int_to_ptr.vmem [resolvable:$true] %s31
      %34 = dma.vmem_to_hbm [thread:$0]  %s32, 128, %s1, [#allocation4]
    $region13: #{tpu_custom_call.1} parent=1 // pred_fallthru
      _
    // Predicated region
    $region14: #{tpu_custom_call.1} parent=1 // pred_check
      _
    $region15: #{tpu_custom_call.1} parent=1 // pred_check_branch
      %36 = sbr.rel (0) target = $region17
    $region16: #{tpu_custom_call.1} parent=1 // pred_region
      %37 = dma.done [#allocation4], 128
    $region17: #{tpu_custom_call.1} parent=1 // pred_fallthru
      _
    %38 = vsyncpa [#allocation3], 1
    %39 = vsyncpa [#allocation4], 1

// kernel: tpu_custom_call.1
$region0: #{tpu_custom_call.1}
  #allocation0 [shape = 'u32[]', space=smem, size = 0x4, offset = 0x4, fixed_abs, tag = 'smem constant byte address 0x4 - core index']
  #allocation1 [shape = 'u32[144,128]{1,0:T(1,128)}', space=vmem, size = 0x12000, scoped, tag = 'internal scratch']
  %s0 = inlined_call_operand.vmem [shape: f32[2,4,256], index: 0, kind: input, shape index: {}]
  %s1 = inlined_call_operand.hbm [shape: f32[2,4,256], index: 1, kind: input, shape index: {}]
  %s2 = inlined_call_operand.vmem [shape: f32[4,4,1], index: 2, kind: input, shape index: {}]
  %s3 = inlined_call_operand.vmem [shape: f32[3,1,256], index: 3, kind: input, shape index: {}]
  %s4 = inlined_call_operand.hbm [shape: f32[2,4,256], index: 4, kind: output, shape index: {}]
  %s5 = sld [smem:[#allocation0]]
  $region30: #{tpu_custom_call.1} parent=0
    _
  %s7 = ssub.s32 1, %s5
  %s8 = scalar_select 0, %s7, %s5
  $region1: #{tpu_custom_call.1} parent=0
    #allocation2 [shape = 'u8[8192]{0}', space=vmem, size = 0x2000, scoped, tag = 'input window, operand 1, single buffered']
    #allocation3 [shape = 's32[1]{0}', space=sflag, size = 0x4, scoped, tag = 'scoped memory for tpu_custom_call.1']
    #allocation4 [shape = 's32[1]{0}', space=sflag, size = 0x4, scoped, tag = 'scoped memory for tpu_custom_call.1']
    #allocation5 [shape = 'u8[8192]{0}', space=vmem, size = 0x2000, scoped, tag = 'output window, operand 0, single buffered']
    %9 = vsyncpa [#allocation3], 0
    %10 = vsyncpa [#allocation4], 0
    // Predicated region
    $region2: #{tpu_custom_call.1} parent=1 // pred_check
      _
    $region3: #{tpu_custom_call.1} parent=1 // pred_check_branch
      %12 = sbr.rel (0) target = $region5
    $region4: #{tpu_custom_call.1} parent=1 // pred_region
      _
    $region5: #{tpu_custom_call.1} parent=1 // pred_fallthru
      _
    // Predicated region
    $region6: #{tpu_custom_call.1} parent=1 // pred_check
      _
    $region7: #{tpu_custom_call.1} parent=1 // pred_check_branch
      %14 = sbr.rel (0) target = $region9
    $region8: #{tpu_custom_call.1} parent=1 // pred_region
      %s16 = ssub.s32 256, 256
      %17 = vsyncadd [#allocation3], %s16
      %s18 = sshll.u32 [#allocation2], 4
      %s19 = int_to_ptr.vmem [resolvable:$true] %s18
      %24 = dma.hbm_to_vmem [thread:$0]  %s1, 256, %s19, [#allocation3], 128, 128, 8
    $region9: #{tpu_custom_call.1} parent=1 // pred_fallthru
      _
    // Predicated region
    $region10: #{tpu_custom_call.1} parent=1 // pred_check
      _
    $region11: #{tpu_custom_call.1} parent=1 // pred_check_branch
      %26 = sbr.rel (0) target = $region13
    $region12: #{tpu_custom_call.1} parent=1 // pred_region
      _
    $region13: #{tpu_custom_call.1} parent=1 // pred_fallthru
      _
    // Predicated region
    $region14: #{tpu_custom_call.1} parent=1 // pred_check
      _
    $region15: #{tpu_custom_call.1} parent=1 // pred_check_branch
      %28 = sbr.rel (0) target = $region17
    $region16: #{tpu_custom_call.1} parent=1 // pred_region
      _
    $region17: #{tpu_custom_call.1} parent=1 // pred_fallthru
      _
    // Predicated region
    $region18: #{tpu_custom_call.1} parent=1 // pred_check
      _
    $region19: #{tpu_custom_call.1} parent=1 // pred_check_branch
      %30 = sbr.rel (0) target = $region21
    $region20: #{tpu_custom_call.1} parent=1 // pred_region
      %31 = dma.done [#allocation3], 256
    $region21: #{tpu_custom_call.1} parent=1 // pred_fallthru
      _
    %v32 = vld [vmem:[%s0] sm:$0xff]
    %v33 = vld [vmem:[%s0 + $0x8] sm:$0xff]
    %v34 = vld [vmem:[#allocation2] sm:$0xff]
    %v35 = vld [vmem:[#allocation2 + $0x8] sm:$0xff]
    %v38 = vcombine.high %v32, %v32
    %v39 = vcombine.high %v33, %v33
    %42 = vrot.lane.b32.xlu0 %v32, 112
    %v43 = vpop.permute.xlu0 %42
    %44 = vrot.lane.b32.xlu0 %v33, 112
    %v45 = vpop.permute.xlu0 %44
    %46 = vrot.lane.b32.xlu0 %v38, 112
    %v47 = vpop.permute.xlu0 %46
    %48 = vrot.lane.b32.xlu0 %v39, 112
    %v49 = vpop.permute.xlu0 %48
    %v50 = vlaneseq
    %v51 = vand.u32 %v50, 127
    %vm52 = vcmp.lt.s32.totalorder %v51, 112
    %v53 = vsel %vm52, %v43, %v47
    %v54 = vsel %vm52, %v45, %v49
    %v55 = vsel %vm52, %v47, %v43
    %v56 = vsel %vm52, %v49, %v45
    %57 = vrot.lane.b32.xlu0 %v32, 127
    %v58 = vpop.permute.xlu0 %57
    %59 = vrot.lane.b32.xlu0 %v33, 127
    %v60 = vpop.permute.xlu0 %59
    %61 = vrot.lane.b32.xlu0 %v38, 127
    %v62 = vpop.permute.xlu0 %61
    %63 = vrot.lane.b32.xlu0 %v39, 127
    %v64 = vpop.permute.xlu0 %63
    %vm65 = vcmp.lt.s32.totalorder %v51, 127
    %v66 = vsel %vm65, %v58, %v62
    %v67 = vsel %vm65, %v60, %v64
    %v68 = vsel %vm65, %v62, %v58
    %v69 = vsel %vm65, %v64, %v60
    %70 = vrot.lane.b32.xlu0 %v32, 15
    %v71 = vpop.permute.xlu0 %70
    %72 = vrot.lane.b32.xlu0 %v33, 15
    %v73 = vpop.permute.xlu0 %72
    %74 = vrot.lane.b32.xlu0 %v38, 15
    %v75 = vpop.permute.xlu0 %74
    %76 = vrot.lane.b32.xlu0 %v39, 15
    %v77 = vpop.permute.xlu0 %76
    %vm78 = vcmp.lt.s32.totalorder %v51, 15
    %v79 = vsel %vm78, %v71, %v75
    %v80 = vsel %vm78, %v73, %v77
    %v81 = vsel %vm78, %v75, %v71
    %v82 = vsel %vm78, %v77, %v73
    %v83 = vsub.f32 %v53, %v32
    %v84 = vsub.f32 %v55, %v38
    %v85 = vsub.f32 %v54, %v33
    %v86 = vsub.f32 %v56, %v39
    %v87 = vsub.f32 %v66, %v32
    %v88 = vsub.f32 %v68, %v38
    %v89 = vsub.f32 %v67, %v33
    %v90 = vsub.f32 %v69, %v39
    %v91 = vsub.f32 %v81, %v32
    %v92 = vsub.f32 %v79, %v38
    %v93 = vsub.f32 %v82, %v33
    %v94 = vsub.f32 %v80, %v39
    %v95 = vld [vmem:[%s3] sm:$0x3]
    %v96 = vld [vmem:[%s3 + $0x2] sm:$0x3]
    %v97 = vld [vmem:[%s3 + $0x4] sm:$0x3]
    %v98 = vmul.f32 %v83, %v83
    %v99 = vmul.f32 %v84, %v84
    %v100 = vmul.f32 %v85, %v85
    %v101 = vmul.f32 %v86, %v86
    %v103 = vlaneseq
    %v104 = vshrl.u32 %v103, 7
    %v105 = vsub.s32 0, %v104
    %v106 = vrot.slane %v95, %v105
    %v107 = vlaneseq
    %v108 = vshrl.u32 %v107, 7
    %v109 = vsub.s32 1, %v108
    %v110 = vrot.slane %v95, %v109
    %v113 = vmul.f32 %v98, %v106
    %v114 = vmul.f32 %v99, %v110
    %v115 = vmul.f32 %v100, %v106
    %v116 = vmul.f32 %v101, %v110
    %v117 = vmul.f32 %v87, %v87
    %v118 = vmul.f32 %v88, %v88
    %v119 = vmul.f32 %v89, %v89
    %v120 = vmul.f32 %v90, %v90
    %v122 = vlaneseq
    %v123 = vshrl.u32 %v122, 7
    %v124 = vsub.s32 0, %v123
    %v125 = vrot.slane %v96, %v124
    %v126 = vlaneseq
    %v127 = vshrl.u32 %v126, 7
    %v128 = vsub.s32 1, %v127
    %v129 = vrot.slane %v96, %v128
    %v132 = vmul.f32 %v117, %v125
    %v133 = vmul.f32 %v118, %v129
    %v134 = vmul.f32 %v119, %v125
    %v135 = vmul.f32 %v120, %v129
    %v136 = vadd.f32 %v113, %v132
    %v137 = vadd.f32 %v114, %v133
    %v138 = vadd.f32 %v115, %v134
    %v139 = vadd.f32 %v116, %v135
    %v140 = vmul.f32 %v91, %v91
    %v141 = vmul.f32 %v92, %v92
    %v142 = vmul.f32 %v93, %v93
    %v143 = vmul.f32 %v94, %v94
    %v145 = vlaneseq
    %v146 = vshrl.u32 %v145, 7
    %v147 = vsub.s32 0, %v146
    %v148 = vrot.slane %v97, %v147
    %v149 = vlaneseq
    %v150 = vshrl.u32 %v149, 7
    %v151 = vsub.s32 1, %v150
    %v152 = vrot.slane %v97, %v151
    %v155 = vmul.f32 %v140, %v148
    %v156 = vmul.f32 %v141, %v152
    %v157 = vmul.f32 %v142, %v148
    %v158 = vmul.f32 %v143, %v152
    %v159 = vadd.f32 %v136, %v155
    %v160 = vadd.f32 %v137, %v156
    %v161 = vadd.f32 %v138, %v157
    %v162 = vadd.f32 %v139, %v158
    %vm163 = vcmask 1043456
    %v164 = vsel %vm163, %v159, 0.0
    %v165 = vsel %vm163, %v160, 0.0
    %v166 = vadd.f32 %v164, %v165
    %167 = vadd.xlane.f32.xlu0 %v166
    %v168 = vpop.xlane.xlu0 %167
    %v169 = vsel %vm163, %v161, 0.0
    %v170 = vsel %vm163, %v162, 0.0
    %v171 = vadd.f32 %v169, %v170
    %172 = vadd.xlane.f32.xlu0 %v171
    %v173 = vpop.xlane.xlu0 %172
    %v174 = vld [vmem:[%s2] sm:$0xf]
    %v175 = vld [vmem:[%s2 + $0x4] sm:$0xf]
    %v176 = vld [vmem:[%s2 + $0x8] sm:$0xf]
    %v177 = vld [vmem:[%s2 + $0xc] sm:$0xf]
    %v178 = vadd.f32 %v168, %v175
    %v179 = vadd.f32 %v173, %v175
    %v180 = vrsqrt.pop %v178
    %v181 = vrsqrt.pop %v179
    %v182 = vmul.f32 %v174, %v180
    %v183 = vmul.f32 %v174, %v181
    %185 = vset.pattern.permute.xlu0 0
    %186 = vperm.xlu0 %185, %v182
    %v187 = vpop.permute.xlu0 %186
    %189 = vset.pattern.permute.xlu0 0
    %190 = vperm.xlu0 %189, %v183
    %v191 = vpop.permute.xlu0 %190
    %v193 = vunpack.c.l.s4 839922192
    %v194 = vunpack.c.0.s8 %v193
    %v195 = vlaneseq
    %v196 = vshrl.u32 %v195, 7
    %v197 = vsub.s32 %v194, %v196
    %v198 = vrot.slane %v187, %v197
    %v200 = vunpack.c.l.s4 839922192
    %v201 = vunpack.c.0.s8 %v200
    %v202 = vlaneseq
    %v203 = vshrl.u32 %v202, 7
    %v204 = vsub.s32 %v201, %v203
    %v205 = vrot.slane %v191, %v204
    %v208 = vmul.f32 %v32, %v198
    %v209 = vmul.f32 %v33, %v205
    %211 = vset.pattern.permute.xlu0 0
    %212 = vperm.xlu0 %211, %v176
    %v213 = vpop.permute.xlu0 %212
    %v215 = vunpack.c.l.s4 839922192
    %v216 = vunpack.c.0.s8 %v215
    %v217 = vlaneseq
    %v218 = vshrl.u32 %v217, 7
    %v219 = vsub.s32 %v216, %v218
    %v220 = vrot.slane %v213, %v219
    %v222 = vadd.f32 %v208, %v220
    %v223 = vadd.f32 %v209, %v220
    %v224 = vadd.f32 %v222, %v34
    %v225 = vadd.f32 %v223, %v35
    %v226 = vmin.f32 %v224, 30.0
    %v227 = vmin.f32 %v225, 30.0
    %v228 = vmul.f32 %v226, 1.442695
    %v229 = vpow.pop %v228
    %v230 = vmul.f32 %v227, 1.442695
    %v231 = vpow.pop %v230
    %v232 = vadd.f32 %v229, 2.0
    %v233 = vadd.f32 %v231, 2.0
    %v234 = vmul.f32 %v229, %v232
    %v235 = vmul.f32 %v231, %v233
    %v236 = vmul.f32 %v224, %v234
    %v237 = vmul.f32 %v225, %v235
    %v238 = vadd.f32 %v234, 2.0
    %v239 = vadd.f32 %v235, 2.0
    %v240 = vrcp.pop %v238
    %v241 = vrcp.pop %v239
    %v242 = vmul.f32 %v236, %v240
    %v243 = vmul.f32 %v237, %v241
    %245 = vset.pattern.permute.xlu0 0
    %246 = vperm.xlu0 %245, %v177
    %v247 = vpop.permute.xlu0 %246
    %v249 = vunpack.c.l.s4 839922192
    %v250 = vunpack.c.0.s8 %v249
    %v251 = vlaneseq
    %v252 = vshrl.u32 %v251, 7
    %v253 = vsub.s32 %v250, %v252
    %v254 = vrot.slane %v247, %v253
    %v256 = vadd.f32 %v242, %v254
    %v257 = vadd.f32 %v243, %v254
    %258 = vst [vmem:[#allocation5] sm:$0xff] %v256
    %259 = vst [vmem:[#allocation5 + $0x8] sm:$0xff] %v257
    // Predicated region
    $region22: #{tpu_custom_call.1} parent=1 // pred_check
      _
    $region23: #{tpu_custom_call.1} parent=1 // pred_check_branch
      %261 = sbr.rel (0) target = $region25
    $region24: #{tpu_custom_call.1} parent=1 // pred_region
      %s263 = ssub.s32 256, 256
      %264 = vsyncadd [#allocation4], %s263
      %s265 = sshll.u32 [#allocation5], 4
      %s266 = int_to_ptr.vmem [resolvable:$true] %s265
      %271 = dma.vmem_to_hbm [thread:$0]  %s266, 256, %s4, [#allocation4], 128, 128, 8
    $region25: #{tpu_custom_call.1} parent=1 // pred_fallthru
      _
    // Predicated region
    $region26: #{tpu_custom_call.1} parent=1 // pred_check
      _
    $region27: #{tpu_custom_call.1} parent=1 // pred_check_branch
      %273 = sbr.rel (0) target = $region29
    $region28: #{tpu_custom_call.1} parent=1 // pred_region
      %274 = dma.done [#allocation4], 256
    $region29: #{tpu_custom_call.1} parent=1 // pred_fallthru
      _
    %275 = vsyncpa [#allocation3], 1
    %276 = vsyncpa [#allocation4], 1

</llo_original>
